<compile_context>
chip_gen: v6e
topology: v6e:2x2x1
jax: 0.10.0
libtpu: 0.0.40
codegen_flags: <defaults>
</compile_context>

<pallas_src>
import jax
import jax.numpy as jnp
import numpy as np
from jax.experimental import pallas as pl
from jax.experimental.pallas import tpu as pltpu


def gnn_decoder_kernel(q_ref, v_ref, adj_ref, smask_ref, w_ref, out_ref):
    """One batch tile per grid step.

    q_ref     : (TB, LANES) f32   Q zero-padded to lane width (aliased w/ output)
    v_ref     : (TB, N, H)  bf16  V streamed as bf16 (half the DMA bytes)
    adj_ref   : (TB, N)     f32
    smask_ref : (TB, N)     f32
    w_ref     : (2H, LANES) bf16  [W0^T ; W1^T], zero-padded on the lane axis
    out_ref   : (TB, LANES) f32
    """
    H = v_ref.shape[2]

    # Softmax over the N neighbours (exp on the EUP; exact normalization —
    # the divide is tiny compared to the N-reduction below).
    a = adj_ref[...]
    a = a - jnp.max(a, axis=-1, keepdims=True)
    e = jnp.exp(a)
    a = e / jnp.sum(e, axis=-1, keepdims=True)                              # (TB, N)

    # Gate weights in 2D: w0 = a*sm, w1 = a - w0 (no (1 - sm) materialization).
    g0 = a * smask_ref[...]                                                 # (TB, N)
    g1 = a - g0                                                             # (TB, N)

    # bf16 DMA, f32 VPU math (portable: v5e has no bf16 VALU).
    v = v_ref[...].astype(jnp.float32)                                      # (TB, N, H)

    # Reduce over N BEFORE the projection: gating + weighted sum are linear in V.
    x0 = jnp.sum(g0[:, :, None] * v, axis=1)                                # (TB, H)
    x1 = jnp.sum(g1[:, :, None] * v, axis=1)                                # (TB, H)

    # Two small MXU dots against static slices of the resident weight block;
    # no VMEM staging scratch, f32 accumulation.
    ctx = (
        jnp.dot(x0.astype(jnp.bfloat16), w_ref[:H, :],
                preferred_element_type=jnp.float32)
        + jnp.dot(x1.astype(jnp.bfloat16), w_ref[H:, :],
                  preferred_element_type=jnp.float32)
    )                                                                       # (TB, LANES)

    # Lane-dense store; padded lanes of Q and W are zero so they stay zero.
    out_ref[...] = q_ref[...] + ctx


def pack_weights(W0, W1):
    """One-time parameter prep (keep OUTSIDE the per-call hot path).

    nn.Linear weights are (H_out, H_in); pack [W0^T ; W1^T] -> (2H, H), zero-pad
    the lane (output) axis up to a multiple of 128, and cast to bf16 for the MXU.
    """
    H = W0.shape[0]
    lanes = -(-H // 128) * 128
    wcat = jnp.concatenate(
        [jnp.asarray(W0, jnp.float32).T, jnp.asarray(W1, jnp.float32).T], axis=0)
    wcat = jnp.pad(wcat, ((0, 0), (0, lanes - H)))
    return wcat.astype(jnp.bfloat16)                                        # (2H, lanes)


def _round_up(x, m):
    return -(-x // m) * m


def _pad_batch(x, b_pad):
    pad = b_pad - x.shape[0]
    if pad == 0:
        return x
    return jnp.pad(x, ((0, pad),) + ((0, 0),) * (x.ndim - 1))


def gnn_decoder_forward(Q, K, V, adj, s_mask, Wcat):
    """Forward pass. K is accepted for API parity but unused (as in PyTorch)."""
    del K  # declared by the module, never used in forward()
    B, H = Q.shape
    N = V.shape[1]
    lanes = Wcat.shape[-1]

    # --- batch tile selection -------------------------------------------------
    # Per-row per-step tile bytes: V in bf16 + adj/s_mask in f32 + Q/out in f32.
    bytes_per_row = 2 * N * H + 4 * (2 * N) + 4 * (2 * lanes)
    budget = 10 * 1024 * 1024          # per-step tile target; double-buffered
    block_b = max(8, min(_round_up(B, 8), (budget // max(bytes_per_row, 1)) // 8 * 8))
    if B >= 16:
        # >= 2 grid steps so the "parallel" batch axis can shard across the two
        # v7x TensorCores (and keep the DMA pipeline busy on v5e/v6e).
        block_b = min(block_b, _round_up(pl.cdiv(B, 2), 8))
    b_pad = _round_up(B, block_b)
    grid = (b_pad // block_b,)

    # --- wrapper-side layout plumbing (padding + dtype for the DMA stream) ----
    q_pad = jnp.pad(jnp.asarray(Q, jnp.float32), ((0, 0), (0, lanes - H)))
    q_pad = _pad_batch(q_pad, b_pad)
    v_bf16 = _pad_batch(jnp.asarray(V, jnp.bfloat16), b_pad)
    adj_f32 = _pad_batch(jnp.asarray(adj, jnp.float32), b_pad)
    sm_f32 = _pad_batch(jnp.asarray(s_mask, jnp.float32), b_pad)

    out_padded = pl.pallas_call(
        gnn_decoder_kernel,
        out_shape=jax.ShapeDtypeStruct((b_pad, lanes), jnp.float32),
        grid=grid,
        in_specs=[
            pl.BlockSpec((block_b, lanes), lambda i: (i, 0)),      # Q (padded, aliased)
            pl.BlockSpec((block_b, N, H), lambda i: (i, 0, 0)),    # V (bf16 stream)
            pl.BlockSpec((block_b, N), lambda i: (i, 0)),          # adj
            pl.BlockSpec((block_b, N), lambda i: (i, 0)),          # s_mask
            pl.BlockSpec((2 * H, lanes), lambda i: (0, 0)),        # fused weights (resident)
        ],
        out_specs=pl.BlockSpec((block_b, lanes), lambda i: (i, 0)),
        input_output_aliases={0: 0},                               # accumulate ctx into Q
        compiler_params=pltpu.CompilerParams(
            dimension_semantics=("parallel",),
            vmem_limit_bytes=32 * 1024 * 1024),
    )(q_pad, v_bf16, adj_f32, sm_f32, Wcat)

    return out_padded[:B, :H]


def reference_forward(Q, K, V, adj, s_mask, W0, W1):
    """Pure-JAX reference mirroring the PyTorch forward exactly (fp32)."""
    del K
    a = jax.nn.softmax(adj[:, None, :], axis=2)                    # (B,1,N)
    V0 = jnp.einsum("bnh,kh->bnk", V, W0)                          # Linear: x @ W^T
    V1 = jnp.einsum("bnh,kh->bnk", V, W1)
    sm = s_mask[:, :, None].astype(jnp.float32)
    Vm = V0 * sm + V1 * (1.0 - sm)
    return Q + jnp.einsum("bon,bnh->boh", a, Vm)[:, 0, :]


if __name__ == "__main__":
    B, N, H = 2, 8, 32
    key = jax.random.PRNGKey(0)
    kq, kk, kv, ka, km, kw0, kw1, kl = jax.random.split(key, 8)

    Q = jax.random.normal(kq, (B, H), jnp.float32)
    K = jax.random.normal(kk, (B, N, H), jnp.float32)
    V = jax.random.normal(kv, (B, N, H), jnp.float32)
    adj = jax.random.normal(ka, (B, N), jnp.float32)
    s_mask = (jax.random.uniform(km, (B, N)) > 0.5).astype(jnp.float32)

    # nn.Linear-style params (weight = (out, in)).
    bound = 1.0 / np.sqrt(H)
    W0 = jax.random.uniform(kw0, (H, H), jnp.float32, -bound, bound)   # Wr0.weight
    W1 = jax.random.uniform(kw1, (H, H), jnp.float32, -bound, bound)   # Wr1.weight
    # self.linear(hidden*2 -> 1) exists in __init__ but is unused in forward().
    _linear_w = jax.random.uniform(kl, (1, 2 * H), jnp.float32, -bound, bound)

    Wcat = pack_weights(W0, W1)          # one-time prep, outside the hot path
    fwd = jax.jit(gnn_decoder_forward)

    out = jax.block_until_ready(fwd(Q, K, V, adj, s_mask, Wcat))

    ref = reference_forward(Q, K, V, adj, s_mask, W0, W1)
    # bf16 V streaming + bf16 MXU inputs -> relaxed tolerance vs fp32 reference.
    np.testing.assert_allclose(np.asarray(out), np.asarray(ref), rtol=2e-2, atol=2e-2)

    print("KERNEL_OK")
</pallas_src>

<mosaic_0001>
module attributes {stable_mosaic.version = 11 : i64} {
  func.func @gnn_decoder_kernel(%arg0: i32, %arg1: memref<8x128xf32, #tpu.memory_space<vmem>>, %arg2: memref<8x8x32xbf16, #tpu.memory_space<vmem>>, %arg3: memref<8x8xf32, #tpu.memory_space<vmem>>, %arg4: memref<8x8xf32, #tpu.memory_space<vmem>>, %arg5: memref<64x128xbf16, #tpu.memory_space<vmem>>, %arg6: memref<8x128xf32, #tpu.memory_space<vmem>>) attributes {dimension_semantics = [#tpu.dimension_semantics<parallel>], iteration_bounds = array<i64: 1>, scalar_prefetch = 0 : i64, scratch_operands = 0 : i64, tpu.core_type = #tpu.core_type<tc>, window_params = [{transform_indices = @transform_0, window_bounds = array<i64: 8, 128>}, {transform_indices = @transform_1, window_bounds = array<i64: 8, 8, 32>}, {transform_indices = @transform_2, window_bounds = array<i64: 8, 8>}, {transform_indices = @transform_3, window_bounds = array<i64: 8, 8>}, {pipeline_mode = #tpu.pipeline_mode<synchronous>, transform_indices = @transform_4, window_bounds = array<i64: 64, 128>}, {transform_indices = @transform_5, window_bounds = array<i64: 8, 128>}]} {
    %c0 = arith.constant 0 : index
    %c0_0 = arith.constant 0 : index
    %0 = vector.load %arg3[%c0, %c0_0] : memref<8x8xf32, #tpu.memory_space<vmem>>, vector<8x8xf32>
    %cst = arith.constant dense<0xFF800000> : vector<8xf32>
    %1 = vector.multi_reduction <maximumf>, %0, %cst [1] : vector<8x8xf32> to vector<8xf32>
    %2 = vector.shape_cast %1 : vector<8xf32> to vector<8x1xf32>
    %3 = vector.broadcast %2 : vector<8x1xf32> to vector<8x8xf32>
    %4 = arith.subf %0, %3 : vector<8x8xf32>
    %5 = math.exp %4 : vector<8x8xf32>
    %cst_1 = arith.constant dense<0.000000e+00> : vector<8xf32>
    %6 = vector.multi_reduction <add>, %5, %cst_1 [1] : vector<8x8xf32> to vector<8xf32>
    %7 = vector.shape_cast %6 : vector<8xf32> to vector<8x1xf32>
    %8 = vector.broadcast %7 : vector<8x1xf32> to vector<8x8xf32>
    %9 = arith.divf %5, %8 : vector<8x8xf32>
    %c0_2 = arith.constant 0 : index
    %c0_3 = arith.constant 0 : index
    %10 = vector.load %arg4[%c0_2, %c0_3] : memref<8x8xf32, #tpu.memory_space<vmem>>, vector<8x8xf32>
    %11 = arith.mulf %9, %10 : vector<8x8xf32>
    %12 = arith.subf %9, %11 : vector<8x8xf32>
    %c0_4 = arith.constant 0 : index
    %c0_5 = arith.constant 0 : index
    %c0_6 = arith.constant 0 : index
    %13 = vector.load %arg2[%c0_4, %c0_5, %c0_6] : memref<8x8x32xbf16, #tpu.memory_space<vmem>>, vector<8x8x32xbf16>
    %14 = arith.extf %13 : vector<8x8x32xbf16> to vector<8x8x32xf32>
    %15 = vector.shape_cast %11 : vector<8x8xf32> to vector<8x8x1xf32>
    %16 = vector.broadcast %15 : vector<8x8x1xf32> to vector<8x8x32xf32>
    %17 = arith.mulf %16, %14 : vector<8x8x32xf32>
    %cst_7 = arith.constant dense<0.000000e+00> : vector<8x32xf32>
    %18 = vector.multi_reduction <add>, %17, %cst_7 [1] : vector<8x8x32xf32> to vector<8x32xf32>
    %19 = vector.shape_cast %12 : vector<8x8xf32> to vector<8x8x1xf32>
    %20 = vector.broadcast %19 : vector<8x8x1xf32> to vector<8x8x32xf32>
    %21 = arith.mulf %20, %14 : vector<8x8x32xf32>
    %cst_8 = arith.constant dense<0.000000e+00> : vector<8x32xf32>
    %22 = vector.multi_reduction <add>, %21, %cst_8 [1] : vector<8x8x32xf32> to vector<8x32xf32>
    %23 = arith.truncf %18 : vector<8x32xf32> to vector<8x32xbf16>
    %c0_9 = arith.constant 0 : index
    %c0_10 = arith.constant 0 : index
    %24 = vector.load %arg5[%c0_9, %c0_10] : memref<64x128xbf16, #tpu.memory_space<vmem>>, vector<32x128xbf16>
    %cst_11 = arith.constant dense<0.000000e+00> : vector<8x128xf32>
    %25 = tpu.matmul %23, %24, %cst_11 {dimension_numbers = #tpu.dot_dimension_numbers<[1], [0], [0], [1], [0, 0, 1, 1], [], []>} : vector<8x32xbf16>, vector<32x128xbf16>, vector<8x128xf32> -> vector<8x128xf32>
    %26 = arith.truncf %22 : vector<8x32xf32> to vector<8x32xbf16>
    %c32 = arith.constant 32 : index
    %c0_12 = arith.constant 0 : index
    %27 = vector.load %arg5[%c32, %c0_12] : memref<64x128xbf16, #tpu.memory_space<vmem>>, vector<32x128xbf16>
    %cst_13 = arith.constant dense<0.000000e+00> : vector<8x128xf32>
    %28 = tpu.matmul %26, %27, %cst_13 {dimension_numbers = #tpu.dot_dimension_numbers<[1], [0], [0], [1], [0, 0, 1, 1], [], []>} : vector<8x32xbf16>, vector<32x128xbf16>, vector<8x128xf32> -> vector<8x128xf32>
    %29 = arith.addf %25, %28 : vector<8x128xf32>
    %c0_14 = arith.constant 0 : index
    %c0_15 = arith.constant 0 : index
    %30 = vector.load %arg1[%c0_14, %c0_15] : memref<8x128xf32, #tpu.memory_space<vmem>>, vector<8x128xf32>
    %31 = arith.addf %30, %29 : vector<8x128xf32>
    %c0_16 = arith.constant 0 : index
    %c0_17 = arith.constant 0 : index
    %32 = vector.load %arg6[%c0_16, %c0_17] : memref<8x128xf32, #tpu.memory_space<vmem>>, vector<8x128xf32>
    tpu.vector_store %arg6[%c0_16, %c0_17], %31 {strides = array<i32>} : memref<8x128xf32, #tpu.memory_space<vmem>>, vector<8x128xf32>,
    return
  }
  func.func @transform_0(%arg0: i32) -> (i32, i32) {
    %c0_i32 = arith.constant 0 : i32
    %c0_i32_0 = arith.constant 0 : i32
    return %arg0, %c0_i32 : i32, i32
  }
  func.func @transform_1(%arg0: i32) -> (i32, i32, i32) {
    %c0_i32 = arith.constant 0 : i32
    %c0_i32_0 = arith.constant 0 : i32
    %c0_i32_1 = arith.constant 0 : i32
    return %arg0, %c0_i32, %c0_i32_0 : i32, i32, i32
  }
  func.func @transform_2(%arg0: i32) -> (i32, i32) {
    %c0_i32 = arith.constant 0 : i32
    %c0_i32_0 = arith.constant 0 : i32
    return %arg0, %c0_i32 : i32, i32
  }
  func.func @transform_3(%arg0: i32) -> (i32, i32) {
    %c0_i32 = arith.constant 0 : i32
    %c0_i32_0 = arith.constant 0 : i32
    return %arg0, %c0_i32 : i32, i32
  }
  func.func @transform_4(%arg0: i32) -> (i32, i32) {
    %c0_i32 = arith.constant 0 : i32
    %c0_i32_0 = arith.constant 0 : i32
    %c0_i32_1 = arith.constant 0 : i32
    return %c0_i32, %c0_i32_0 : i32, i32
  }
  func.func @transform_5(%arg0: i32) -> (i32, i32) {
    %c0_i32 = arith.constant 0 : i32
    %c0_i32_0 = arith.constant 0 : i32
    return %arg0, %c0_i32 : i32, i32
  }
}

</mosaic_0001>

<llo_original>
// kernel: gnn_decoder_forward.1
$region0: #{gnn_decoder_forward.1}
  #allocation0 [shape = 'u32[]', space=smem, size = 0x4, offset = 0x4, fixed_abs, tag = 'smem constant byte address 0x4 - core index']
  #allocation1 [shape = 'u32[144,128]{1,0:T(1,128)}', space=vmem, size = 0x12000, scoped, tag = 'internal scratch']
  %s0 = inlined_call_operand.vmem [shape: f32[8,128], index: 0, kind: input, shape index: {}, may-alias: {0,5}]
  %s1 = inlined_call_operand.vmem [shape: bf16[8,8,32], index: 1, kind: input, shape index: {}]
  %s2 = inlined_call_operand.vmem [shape: f32[8,8], index: 2, kind: input, shape index: {}]
  %s3 = inlined_call_operand.vmem [shape: f32[8,8], index: 3, kind: input, shape index: {}]
  %s4 = inlined_call_operand.vmem [shape: bf16[64,128], index: 4, kind: input, shape index: {}]
  %s5 = inlined_call_operand.vmem [shape: f32[8,128], index: 5, kind: output, shape index: {}, may-alias: {0,5}]
  %s6 = sld [smem:[#allocation0]]
  $region30: #{gnn_decoder_forward.1} parent=0
    _
  %s8 = ssub.s32 1, %s6
  %s9 = scalar_select 0, %s8, %s6
  // Predicated region
  $region2: #{gnn_decoder_forward.1} parent=0 // pred_check
    _
  $region3: #{gnn_decoder_forward.1} parent=0 // pred_check_branch
    %11 = sbr.rel (0) target = $region5
  $region4: #{gnn_decoder_forward.1} parent=0 // pred_region
    _
  $region5: #{gnn_decoder_forward.1} parent=0 // pred_fallthru
    _
  // Predicated region
  $region6: #{gnn_decoder_forward.1} parent=0 // pred_check
    _
  $region7: #{gnn_decoder_forward.1} parent=0 // pred_check_branch
    %13 = sbr.rel (0) target = $region9
  $region8: #{gnn_decoder_forward.1} parent=0 // pred_region
    _
  $region9: #{gnn_decoder_forward.1} parent=0 // pred_fallthru
    _
  // Predicated region
  $region10: #{gnn_decoder_forward.1} parent=0 // pred_check
    _
  $region11: #{gnn_decoder_forward.1} parent=0 // pred_check_branch
    %15 = sbr.rel (0) target = $region13
  $region12: #{gnn_decoder_forward.1} parent=0 // pred_region
    _
  $region13: #{gnn_decoder_forward.1} parent=0 // pred_fallthru
    _
  // Predicated region
  $region14: #{gnn_decoder_forward.1} parent=0 // pred_check
    _
  $region15: #{gnn_decoder_forward.1} parent=0 // pred_check_branch
    %17 = sbr.rel (0) target = $region17
  $region16: #{gnn_decoder_forward.1} parent=0 // pred_region
    _
  $region17: #{gnn_decoder_forward.1} parent=0 // pred_fallthru
    _
  // Predicated region
  $region18: #{gnn_decoder_forward.1} parent=0 // pred_check
    _
  $region19: #{gnn_decoder_forward.1} parent=0 // pred_check_branch
    %19 = sbr.rel (0) target = $region21
  $region20: #{gnn_decoder_forward.1} parent=0 // pred_region
    _
  $region21: #{gnn_decoder_forward.1} parent=0 // pred_fallthru
    _
  %v21 = vld [vmem:[%s2] sm:$0xff]
  %vm22 = vcmask 64512
  %v23 = vsel %vm22, %v21, -inf
  %24 = vmax.xlane.f32.xlu0 %v23
  %v25 = vpop.xlane.xlu0 %24
  %v26 = vsub.f32 %v21, %v25
  %v27 = vmul.f32 %v26, 1.442695
  %v28 = vpow.pop %v27
  %v29 = vsel %vm22, %v28, 0.0
  %30 = vadd.xlane.f32.xlu0 %v29
  %v31 = vpop.xlane.xlu0 %30
  %v32 = vrcp.pop %v31
  %v33 = vmul.f32 %v28, %v32
  %v34 = vld [vmem:[%s3] sm:$0xff]
  %v35 = vmul.f32 %v33, %v34
  %v36 = vsub.f32 %v33, %v35
  %v37 = vld [vmem:[%s1] sm:$0xf]
  %v38 = vld [vmem:[%s1 + $0x4] sm:$0xf]
  %v39 = vld [vmem:[%s1 + $0x8] sm:$0xf]
  %v40 = vld [vmem:[%s1 + $0xc] sm:$0xf]
  %v41 = vld [vmem:[%s1 + $0x10] sm:$0xf]
  %v42 = vld [vmem:[%s1 + $0x14] sm:$0xf]
  %v43 = vld [vmem:[%s1 + $0x18] sm:$0xf]
  %v44 = vld [vmem:[%s1 + $0x1c] sm:$0xf]
  %v45 = vunpack.c.l.bf16 %v37
  %v46 = vunpack.c.l.bf16 %v38
  %v47 = vunpack.c.l.bf16 %v39
  %v48 = vunpack.c.l.bf16 %v40
  %v49 = vunpack.c.l.bf16 %v41
  %v50 = vunpack.c.l.bf16 %v42
  %v51 = vunpack.c.l.bf16 %v43
  %v52 = vunpack.c.l.bf16 %v44
  %v53 = vlaneseq
  %v54 = vshrl.u32 %v53, 7
  %v55 = vsub.s32 0, %v54
  %v56 = vrot.slane %v35, %v55
  %58 = vbcast.lane.b32.xlu0 %v56, 256
  %v59 = vpop.permute.xlu0 %58
  %v60 = vlaneseq
  %v61 = vshrl.u32 %v60, 7
  %v62 = vsub.s32 1, %v61
  %v63 = vrot.slane %v35, %v62
  %65 = vbcast.lane.b32.xlu0 %v63, 256
  %v66 = vpop.permute.xlu0 %65
  %v67 = vlaneseq
  %v68 = vshrl.u32 %v67, 7
  %v69 = vsub.s32 2, %v68
  %v70 = vrot.slane %v35, %v69
  %72 = vbcast.lane.b32.xlu0 %v70, 256
  %v73 = vpop.permute.xlu0 %72
  %v74 = vlaneseq
  %v75 = vshrl.u32 %v74, 7
  %v76 = vsub.s32 3, %v75
  %v77 = vrot.slane %v35, %v76
  %79 = vbcast.lane.b32.xlu0 %v77, 256
  %v80 = vpop.permute.xlu0 %79
  %v81 = vlaneseq
  %v82 = vshrl.u32 %v81, 7
  %v83 = vsub.s32 4, %v82
  %v84 = vrot.slane %v35, %v83
  %86 = vbcast.lane.b32.xlu0 %v84, 256
  %v87 = vpop.permute.xlu0 %86
  %v88 = vlaneseq
  %v89 = vshrl.u32 %v88, 7
  %v90 = vsub.s32 5, %v89
  %v91 = vrot.slane %v35, %v90
  %93 = vbcast.lane.b32.xlu0 %v91, 256
  %v94 = vpop.permute.xlu0 %93
  %v95 = vlaneseq
  %v96 = vshrl.u32 %v95, 7
  %v97 = vsub.s32 6, %v96
  %v98 = vrot.slane %v35, %v97
  %100 = vbcast.lane.b32.xlu0 %v98, 256
  %v101 = vpop.permute.xlu0 %100
  %v102 = vlaneseq
  %v103 = vshrl.u32 %v102, 7
  %v104 = vsub.s32 7, %v103
  %v105 = vrot.slane %v35, %v104
  %107 = vbcast.lane.b32.xlu0 %v105, 256
  %v108 = vpop.permute.xlu0 %107
  %v109 = vmul.f32 %v59, %v45
  %v110 = vmul.f32 %v66, %v46
  %v111 = vmul.f32 %v73, %v47
  %v112 = vmul.f32 %v80, %v48
  %v113 = vmul.f32 %v87, %v49
  %v114 = vmul.f32 %v94, %v50
  %v115 = vmul.f32 %v101, %v51
  %v116 = vmul.f32 %v108, %v52
  %vm117 = vcmask 261120
  %v118 = vsel %vm117, %v109, 0.0
  %v119 = vrot.slane %v118, 4
  %v120 = vadd.f32 %v118, %v119
  %v121 = vrot.slane %v120, 2
  %v122 = vadd.f32 %v120, %v121
  %v123 = vrot.slane %v122, 1
  %v124 = vadd.f32 %v122, %v123
  %v125 = vsel %vm117, %v110, 0.0
  %v126 = vrot.slane %v125, 4
  %v127 = vadd.f32 %v125, %v126
  %v128 = vrot.slane %v127, 2
  %v129 = vadd.f32 %v127, %v128
  %v130 = vrot.slane %v129, 1
  %v131 = vadd.f32 %v129, %v130
  %v132 = vsel %vm117, %v111, 0.0
  %v133 = vrot.slane %v132, 4
  %v134 = vadd.f32 %v132, %v133
  %v135 = vrot.slane %v134, 2
  %v136 = vadd.f32 %v134, %v135
  %v137 = vrot.slane %v136, 1
  %v138 = vadd.f32 %v136, %v137
  %v139 = vsel %vm117, %v112, 0.0
  %v140 = vrot.slane %v139, 4
  %v141 = vadd.f32 %v139, %v140
  %v142 = vrot.slane %v141, 2
  %v143 = vadd.f32 %v141, %v142
  %v144 = vrot.slane %v143, 1
  %v145 = vadd.f32 %v143, %v144
  %v146 = vsel %vm117, %v113, 0.0
  %v147 = vrot.slane %v146, 4
  %v148 = vadd.f32 %v146, %v147
  %v149 = vrot.slane %v148, 2
  %v150 = vadd.f32 %v148, %v149
  %v151 = vrot.slane %v150, 1
  %v152 = vadd.f32 %v150, %v151
  %v153 = vsel %vm117, %v114, 0.0
  %v154 = vrot.slane %v153, 4
  %v155 = vadd.f32 %v153, %v154
  %v156 = vrot.slane %v155, 2
  %v157 = vadd.f32 %v155, %v156
  %v158 = vrot.slane %v157, 1
  %v159 = vadd.f32 %v157, %v158
  %v160 = vsel %vm117, %v115, 0.0
  %v161 = vrot.slane %v160, 4
  %v162 = vadd.f32 %v160, %v161
  %v163 = vrot.slane %v162, 2
  %v164 = vadd.f32 %v162, %v163
  %v165 = vrot.slane %v164, 1
  %v166 = vadd.f32 %v164, %v165
  %v167 = vsel %vm117, %v116, 0.0
  %v168 = vrot.slane %v167, 4
  %v169 = vadd.f32 %v167, %v168
  %v170 = vrot.slane %v169, 2
  %v171 = vadd.f32 %v169, %v170
  %v172 = vrot.slane %v171, 1
  %v173 = vadd.f32 %v171, %v172
  %v174 = vlaneseq
  %v175 = vshrl.u32 %v174, 7
  %v176 = vsub.s32 0, %v175
  %v177 = vrot.slane %v36, %v176
  %179 = vbcast.lane.b32.xlu0 %v177, 256
  %v180 = vpop.permute.xlu0 %179
  %v181 = vlaneseq
  %v182 = vshrl.u32 %v181, 7
  %v183 = vsub.s32 1, %v182
  %v184 = vrot.slane %v36, %v183
  %186 = vbcast.lane.b32.xlu0 %v184, 256
  %v187 = vpop.permute.xlu0 %186
  %v188 = vlaneseq
  %v189 = vshrl.u32 %v188, 7
  %v190 = vsub.s32 2, %v189
  %v191 = vrot.slane %v36, %v190
  %193 = vbcast.lane.b32.xlu0 %v191, 256
  %v194 = vpop.permute.xlu0 %193
  %v195 = vlaneseq
  %v196 = vshrl.u32 %v195, 7
  %v197 = vsub.s32 3, %v196
  %v198 = vrot.slane %v36, %v197
  %200 = vbcast.lane.b32.xlu0 %v198, 256
  %v201 = vpop.permute.xlu0 %200
  %v202 = vlaneseq
  %v203 = vshrl.u32 %v202, 7
  %v204 = vsub.s32 4, %v203
  %v205 = vrot.slane %v36, %v204
  %207 = vbcast.lane.b32.xlu0 %v205, 256
  %v208 = vpop.permute.xlu0 %207
  %v209 = vlaneseq
  %v210 = vshrl.u32 %v209, 7
  %v211 = vsub.s32 5, %v210
  %v212 = vrot.slane %v36, %v211
  %214 = vbcast.lane.b32.xlu0 %v212, 256
  %v215 = vpop.permute.xlu0 %214
  %v216 = vlaneseq
  %v217 = vshrl.u32 %v216, 7
  %v218 = vsub.s32 6, %v217
  %v219 = vrot.slane %v36, %v218
  %221 = vbcast.lane.b32.xlu0 %v219, 256
  %v222 = vpop.permute.xlu0 %221
  %v223 = vlaneseq
  %v224 = vshrl.u32 %v223, 7
  %v225 = vsub.s32 7, %v224
  %v226 = vrot.slane %v36, %v225
  %228 = vbcast.lane.b32.xlu0 %v226, 256
  %v229 = vpop.permute.xlu0 %228
  %v230 = vmul.f32 %v180, %v45
  %v231 = vmul.f32 %v187, %v46
  %v232 = vmul.f32 %v194, %v47
  %v233 = vmul.f32 %v201, %v48
  %v234 = vmul.f32 %v208, %v49
  %v235 = vmul.f32 %v215, %v50
  %v236 = vmul.f32 %v222, %v51
  %v237 = vmul.f32 %v229, %v52
  %v238 = vsel %vm117, %v230, 0.0
  %v239 = vrot.slane %v238, 4
  %v240 = vadd.f32 %v238, %v239
  %v241 = vrot.slane %v240, 2
  %v242 = vadd.f32 %v240, %v241
  %v243 = vrot.slane %v242, 1
  %v244 = vadd.f32 %v242, %v243
  %v245 = vsel %vm117, %v231, 0.0
  %v246 = vrot.slane %v245, 4
  %v247 = vadd.f32 %v245, %v246
  %v248 = vrot.slane %v247, 2
  %v249 = vadd.f32 %v247, %v248
  %v250 = vrot.slane %v249, 1
  %v251 = vadd.f32 %v249, %v250
  %v252 = vsel %vm117, %v232, 0.0
  %v253 = vrot.slane %v252, 4
  %v254 = vadd.f32 %v252, %v253
  %v255 = vrot.slane %v254, 2
  %v256 = vadd.f32 %v254, %v255
  %v257 = vrot.slane %v256, 1
  %v258 = vadd.f32 %v256, %v257
  %v259 = vsel %vm117, %v233, 0.0
  %v260 = vrot.slane %v259, 4
  %v261 = vadd.f32 %v259, %v260
  %v262 = vrot.slane %v261, 2
  %v263 = vadd.f32 %v261, %v262
  %v264 = vrot.slane %v263, 1
  %v265 = vadd.f32 %v263, %v264
  %v266 = vsel %vm117, %v234, 0.0
  %v267 = vrot.slane %v266, 4
  %v268 = vadd.f32 %v266, %v267
  %v269 = vrot.slane %v268, 2
  %v270 = vadd.f32 %v268, %v269
  %v271 = vrot.slane %v270, 1
  %v272 = vadd.f32 %v270, %v271
  %v273 = vsel %vm117, %v235, 0.0
  %v274 = vrot.slane %v273, 4
  %v275 = vadd.f32 %v273, %v274
  %v276 = vrot.slane %v275, 2
  %v277 = vadd.f32 %v275, %v276
  %v278 = vrot.slane %v277, 1
  %v279 = vadd.f32 %v277, %v278
  %v280 = vsel %vm117, %v236, 0.0
  %v281 = vrot.slane %v280, 4
  %v282 = vadd.f32 %v280, %v281
  %v283 = vrot.slane %v282, 2
  %v284 = vadd.f32 %v282, %v283
  %v285 = vrot.slane %v284, 1
  %v286 = vadd.f32 %v284, %v285
  %v287 = vsel %vm117, %v237, 0.0
  %v288 = vrot.slane %v287, 4
  %v289 = vadd.f32 %v287, %v288
  %v290 = vrot.slane %v289, 2
  %v291 = vadd.f32 %v289, %v290
  %v292 = vrot.slane %v291, 1
  %v293 = vadd.f32 %v291, %v292
  %v294 = vpack.c.bf16 %v124, %v124
  %v295 = vpack.c.bf16 %v131, %v131
  %v296 = vpack.c.bf16 %v138, %v138
  %v297 = vpack.c.bf16 %v145, %v145
  %v298 = vpack.c.bf16 %v152, %v152
  %v299 = vpack.c.bf16 %v159, %v159
  %v300 = vpack.c.bf16 %v166, %v166
  %v301 = vpack.c.bf16 %v173, %v173
  %v302 = vld [vmem:[%s4] sm:$0xf]
  %v303 = vld [vmem:[%s4 + $0x4] sm:$0xf]
  %v304 = vld [vmem:[%s4 + $0x8] sm:$0xf]
  %v305 = vld [vmem:[%s4 + $0xc] sm:$0xf]
  %v306 = vpack.c.bf16 %v244, %v244
  %v307 = vpack.c.bf16 %v251, %v251
  %v308 = vpack.c.bf16 %v258, %v258
  %v309 = vpack.c.bf16 %v265, %v265
  %v310 = vpack.c.bf16 %v272, %v272
  %v311 = vpack.c.bf16 %v279, %v279
  %v312 = vpack.c.bf16 %v286, %v286
  %v313 = vpack.c.bf16 %v293, %v293
  %v314 = vld [vmem:[%s4 + $0x10] sm:$0xf]
  %v315 = vld [vmem:[%s4 + $0x14] sm:$0xf]
  %v316 = vld [vmem:[%s4 + $0x18] sm:$0xf]
  %v317 = vld [vmem:[%s4 + $0x1c] sm:$0xf]
  %v326 = vunpack.c.l.b16 %v306
  %v327 = vunpack.c.l.b16 %v307
  %v328 = vunpack.c.l.b16 %v308
  %v329 = vunpack.c.l.b16 %v309
  %v330 = vunpack.c.l.b16 %v310
  %v331 = vunpack.c.l.b16 %v311
  %v332 = vunpack.c.l.b16 %v312
  %v333 = vunpack.c.l.b16 %v313
  %vm334 = vcmask 1041409
  %v335 = vsel %vm334, %v327, %v326
  %vm336 = vcmask 1042434
  %v337 = vsel %vm336, %v328, %v335
  %vm338 = vcmask 1043459
  %v339 = vsel %vm338, %v329, %v337
  %vm340 = vcmask 1044484
  %v341 = vsel %vm340, %v330, %v339
  %vm342 = vcmask 1045509
  %v343 = vsel %vm342, %v331, %v341
  %vm344 = vcmask 1046534
  %v345 = vsel %vm344, %v332, %v343
  %vm346 = vcmask 1047559
  %v347 = vsel %vm346, %v333, %v345
  %v348 = vpack.c.b16 %v347, %v347
  %v353 = vunpack.c.l.b16 %v314
  %v354 = vunpack.c.l.b16 %v315
  %v355 = vunpack.c.l.b16 %v316
  %v356 = vunpack.c.l.b16 %v317
  %v357 = vpack.c.b16 %v354, %v353
  %v358 = vpack.c.b16 %v356, %v355
  %v362 = vsel %vm117, %v348, 0
  %364 = vmatprep.subr.bf16.mxu0 0
  %365 = vmatpush1.bf16.msra.mxu0 0
  %366 = vmatprep.subr.bf16.mxu0 0
  %367 = vmatpush1.bf16.msra.mxu0 0
  %368 = vmatprep.subr.bf16.mxu0 0
  %369 = vmatpush1.bf16.msra.mxu0 0
  %370 = vmatprep.subr.bf16.mxu0 0
  %371 = vmatpush1.bf16.msra.mxu0 0
  %372 = vmatprep.subr.bf16.mxu0 0
  %373 = vmatpush1.bf16.msra.mxu0 0
  %374 = vmatprep.subr.bf16.mxu0 0
  %375 = vmatpush1.bf16.msra.mxu0 0
  %376 = vmatprep.subr.bf16.mxu0 0
  %377 = vmatpush1.bf16.msra.mxu0 %v358
  %378 = vmatprep.subr.bf16.mxu0 0
  %379 = vmatpush1.bf16.msra.mxu0 %v357
  %380 = vmatprep.subr.bf16.mxu0 0
  %381 = vmatpush2.bf16.msra.mxu0 0
  %382 = vmatprep.subr.bf16.mxu0 0
  %383 = vmatpush2.bf16.msra.mxu0 0
  %384 = vmatprep.subr.bf16.mxu0 0
  %385 = vmatpush2.bf16.msra.mxu0 0
  %386 = vmatprep.subr.bf16.mxu0 0
  %387 = vmatpush2.bf16.msra.mxu0 0
  %388 = vmatprep.subr.bf16.mxu0 0
  %389 = vmatpush2.bf16.msra.mxu0 0
  %390 = vmatprep.subr.bf16.mxu0 0
  %391 = vmatpush2.bf16.msra.mxu0 0
  %392 = vmatprep.subr.bf16.mxu0 0
  %393 = vmatpush2.bf16.msra.mxu0 0
  %394 = vmatprep.subr.bf16.mxu0 0
  %395 = vmatpush2.bf16.msra.mxu0 0
  %396 = vmatprep.mubr.bf16.mxu0 0
  %397 = vmatmul.mubr.bf16.gmra.mxu0 %v362
  %v398 = vpop.f32.mrf.mxu0
  %v399 = vadd.f32 0.0, %v398
  %v400 = vpop.f32.mrf.mxu0
  %v401 = vpop.f32.mrf.mxu0
  %v402 = vpop.f32.mrf.mxu0
  %403 = vdwg.mxu0
  %v412 = vunpack.c.l.b16 %v294
  %v413 = vunpack.c.l.b16 %v295
  %v414 = vunpack.c.l.b16 %v296
  %v415 = vunpack.c.l.b16 %v297
  %v416 = vunpack.c.l.b16 %v298
  %v417 = vunpack.c.l.b16 %v299
  %v418 = vunpack.c.l.b16 %v300
  %v419 = vunpack.c.l.b16 %v301
  %v420 = vsel %vm334, %v413, %v412
  %v421 = vsel %vm336, %v414, %v420
  %v422 = vsel %vm338, %v415, %v421
  %v423 = vsel %vm340, %v416, %v422
  %v424 = vsel %vm342, %v417, %v423
  %v425 = vsel %vm344, %v418, %v424
  %v426 = vsel %vm346, %v419, %v425
  %v427 = vpack.c.b16 %v426, %v426
  %v432 = vunpack.c.l.b16 %v302
  %v433 = vunpack.c.l.b16 %v303
  %v434 = vunpack.c.l.b16 %v304
  %v435 = vunpack.c.l.b16 %v305
  %v436 = vpack.c.b16 %v433, %v432
  %v437 = vpack.c.b16 %v435, %v434
  %v441 = vsel %vm117, %v427, 0
  %443 = vmatprep.subr.bf16.mxu0 0
  %444 = vmatpush1.bf16.msra.mxu0 0
  %445 = vmatprep.subr.bf16.mxu0 0
  %446 = vmatpush1.bf16.msra.mxu0 0
  %447 = vmatprep.subr.bf16.mxu0 0
  %448 = vmatpush1.bf16.msra.mxu0 0
  %449 = vmatprep.subr.bf16.mxu0 0
  %450 = vmatpush1.bf16.msra.mxu0 0
  %451 = vmatprep.subr.bf16.mxu0 0
  %452 = vmatpush1.bf16.msra.mxu0 0
  %453 = vmatprep.subr.bf16.mxu0 0
  %454 = vmatpush1.bf16.msra.mxu0 0
  %455 = vmatprep.subr.bf16.mxu0 0
  %456 = vmatpush1.bf16.msra.mxu0 %v437
  %457 = vmatprep.subr.bf16.mxu0 0
  %458 = vmatpush1.bf16.msra.mxu0 %v436
  %459 = vmatprep.subr.bf16.mxu0 0
  %460 = vmatpush2.bf16.msra.mxu0 0
  %461 = vmatprep.subr.bf16.mxu0 0
  %462 = vmatpush2.bf16.msra.mxu0 0
  %463 = vmatprep.subr.bf16.mxu0 0
  %464 = vmatpush2.bf16.msra.mxu0 0
  %465 = vmatprep.subr.bf16.mxu0 0
  %466 = vmatpush2.bf16.msra.mxu0 0
  %467 = vmatprep.subr.bf16.mxu0 0
  %468 = vmatpush2.bf16.msra.mxu0 0
  %469 = vmatprep.subr.bf16.mxu0 0
  %470 = vmatpush2.bf16.msra.mxu0 0
  %471 = vmatprep.subr.bf16.mxu0 0
  %472 = vmatpush2.bf16.msra.mxu0 0
  %473 = vmatprep.subr.bf16.mxu0 0
  %474 = vmatpush2.bf16.msra.mxu0 0
  %475 = vmatprep.mubr.bf16.mxu0 0
  %476 = vmatmul.mubr.bf16.gmra.mxu0 %v441
  %v477 = vpop.f32.mrf.mxu0
  %v478 = vadd.f32 %v399, %v477
  %v479 = vpop.f32.mrf.mxu0
  %v480 = vpop.f32.mrf.mxu0
  %v481 = vpop.f32.mrf.mxu0
  %482 = vdwg.mxu0
  %v483 = vld [vmem:[%s0] sm:$0xff]
  %v484 = vadd.f32 %v483, %v478
  %485 = vst [vmem:[%s5] sm:$0xff] %v484
  // Predicated region
  $region22: #{gnn_decoder_forward.1} parent=0 // pred_check
    _
  $region23: #{gnn_decoder_forward.1} parent=0 // pred_check_branch
    %487 = sbr.rel (0) target = $region25
  $region24: #{gnn_decoder_forward.1} parent=0 // pred_region
    _
  $region25: #{gnn_decoder_forward.1} parent=0 // pred_fallthru
    _
  // Predicated region
  $region26: #{gnn_decoder_forward.1} parent=0 // pred_check
    _
  $region27: #{gnn_decoder_forward.1} parent=0 // pred_check_branch
    %489 = sbr.rel (0) target = $region29
  $region28: #{gnn_decoder_forward.1} parent=0 // pred_region
    _
  $region29: #{gnn_decoder_forward.1} parent=0 // pred_fallthru
    _

</llo_original>
